<compile_context>
chip_gen: v6e
topology: v6e:2x2x1
jax: 0.10.0
libtpu: 0.0.40
codegen_flags: <defaults>
</compile_context>

<pallas_src>
import functools

import jax
import jax.numpy as jnp
from jax.experimental import pallas as pl
from jax.experimental.pallas import tpu as pltpu


def _round_up(x, m):
    return ((x + m - 1) // m) * m


# ----------------------------------------------------------------------------
# Kernel: per-block partial sums of pos_loss, neg_loss and num_pos
# ----------------------------------------------------------------------------
def _focal_hm_kernel(pred_ref, gt_ref, pos_ref, neg_ref, npos_ref, *,
                     n_valid, block_rows, lanes):
    i = pl.program_id(0)

    pred = pred_ref[...]                      # (block_rows, lanes) f32
    gt = gt_ref[...]

    # Validity mask for the zero-padded tail.  Only the last block can contain
    # padding, but the integer compare is cheap VPU filler for a mem-bound
    # kernel and avoids shipping an extra mask array from HBM.
    row_ids = jax.lax.broadcasted_iota(jnp.int32, (block_rows, lanes), 0)
    col_ids = jax.lax.broadcasted_iota(jnp.int32, (block_rows, lanes), 1)
    flat_idx = (i * block_rows + row_ids) * lanes + col_ids
    valid = flat_idx < n_valid

    one = jnp.float32(1.0)
    zero = jnp.float32(0.0)
    pos_inds = jnp.where(jnp.logical_and(gt == one, valid), one, zero)
    neg_inds = jnp.where(jnp.logical_and(gt < one, valid), one, zero)

    one_m_gt = one - gt
    neg_w = one_m_gt * one_m_gt
    neg_w = neg_w * neg_w                     # (1 - gt)^4
    one_m_pred = one - pred

    pos_l = jnp.log(pred) * (one_m_pred * one_m_pred) * pos_inds
    neg_l = jnp.log(one_m_pred) * (pred * pred) * neg_w * neg_inds

    # Partial-reduce (block_rows, lanes) -> (8, lanes): split the sublane axis
    # and add vregs on the VPU.  The cross-lane reduction is deferred to JAX.
    def part(x):
        return jnp.sum(x.reshape(block_rows // 8, 8, lanes), axis=0)

    pos_ref[...] = part(pos_l)[None]          # (1, 8, lanes) full-tile store
    neg_ref[...] = part(neg_l)[None]
    npos_ref[...] = part(pos_inds)[None]


# ----------------------------------------------------------------------------
# Wrapper reproducing FocalLoss_hm.forward / _neg_loss_hm
# ----------------------------------------------------------------------------
def focal_loss_hm(pred, gt, *, lanes=512, block_rows=512):
    assert pred.shape == gt.shape
    n = 1
    for d in pred.shape:
        n *= int(d)

    pred_f = pred.reshape(-1).astype(jnp.float32)
    gt_f = gt.reshape(-1).astype(jnp.float32)

    rows_needed = pl.cdiv(n, lanes)
    br = min(block_rows, max(8, _round_up(rows_needed, 8)))
    num_blocks = pl.cdiv(rows_needed, br)
    total_rows = num_blocks * br
    padded = total_rows * lanes
    if padded != n:
        # Pad pred strictly inside (0, 1) so log() stays finite; padded
        # contributions are zeroed by the in-kernel validity mask.
        pred_f = jnp.pad(pred_f, (0, padded - n), constant_values=0.5)
        gt_f = jnp.pad(gt_f, (0, padded - n), constant_values=0.0)

    pred2 = pred_f.reshape(total_rows, lanes)
    gt2 = gt_f.reshape(total_rows, lanes)

    kernel = functools.partial(_focal_hm_kernel, n_valid=n,
                               block_rows=br, lanes=lanes)
    part_shape = jax.ShapeDtypeStruct((num_blocks, 8, lanes), jnp.float32)
    in_spec = pl.BlockSpec((br, lanes), lambda i: (i, 0))
    out_spec = pl.BlockSpec((1, 8, lanes), lambda i: (i, 0, 0))

    pos_p, neg_p, npos_p = pl.pallas_call(
        kernel,
        out_shape=(part_shape, part_shape, part_shape),
        grid=(num_blocks,),
        in_specs=[in_spec, in_spec],
        out_specs=(out_spec, out_spec, out_spec),
        compiler_params=pltpu.CompilerParams(
            dimension_semantics=("parallel",)),
    )(pred2, gt2)

    pos_loss = jnp.sum(pos_p)
    neg_loss = jnp.sum(neg_p)
    num_pos = jnp.sum(npos_p)
    return jnp.where(num_pos == 0.0,
                     -neg_loss,
                     -(pos_loss + neg_loss) / num_pos)


# ----------------------------------------------------------------------------
# Pure-JAX reference (mirrors the PyTorch _neg_loss_hm exactly)
# ----------------------------------------------------------------------------
def reference_focal_loss_hm(pred, gt):
    pred = pred.astype(jnp.float32)
    gt = gt.astype(jnp.float32)
    pos_inds = (gt == 1.0).astype(jnp.float32)
    neg_inds = (gt < 1.0).astype(jnp.float32)
    neg_weights = jnp.power(1.0 - gt, 4)
    pos_loss = jnp.log(pred) * jnp.power(1.0 - pred, 2) * pos_inds
    neg_loss = (jnp.log(1.0 - pred) * jnp.power(pred, 2)
                * neg_weights * neg_inds)
    num_pos = pos_inds.sum()
    pos_loss = pos_loss.sum()
    neg_loss = neg_loss.sum()
    return jnp.where(num_pos == 0.0,
                     -neg_loss,
                     -(pos_loss + neg_loss) / num_pos)


if __name__ == "__main__":
    B, C, H, W = 2, 4, 16, 16

    key = jax.random.PRNGKey(0)
    k1, k2, k3 = jax.random.split(key, 3)
    # Sigmoid heatmap prediction in (0, 1); ground truth in [0, 0.95) with a
    # few exact-1.0 peaks (CenterNet-style Gaussian heatmap centers).
    pred = jax.nn.sigmoid(jax.random.normal(k1, (B, C, H, W),
                                            dtype=jnp.float32))
    gt = jax.random.uniform(k2, (B, C, H, W), dtype=jnp.float32,
                            minval=0.0, maxval=0.95)
    peaks = jax.random.uniform(k3, (B, C, H, W)) > 0.97
    gt = jnp.where(peaks, jnp.float32(1.0), gt)

    loss_fn = jax.jit(focal_loss_hm)

    # Case 1: normal heatmap with positives.
    loss = jax.block_until_ready(loss_fn(pred, gt))
    ref = jax.block_until_ready(reference_focal_loss_hm(pred, gt))
    assert jnp.allclose(loss, ref, rtol=1e-4, atol=1e-4), (loss, ref)

    # Case 2: no positives (exercises the num_pos == 0 branch).
    gt_nopos = jnp.minimum(gt, 0.9)
    loss0 = jax.block_until_ready(loss_fn(pred, gt_nopos))
    ref0 = jax.block_until_ready(reference_focal_loss_hm(pred, gt_nopos))
    assert jnp.allclose(loss0, ref0, rtol=1e-4, atol=1e-4), (loss0, ref0)

    print("KERNEL_OK")
</pallas_src>

<mosaic_0001>
module attributes {stable_mosaic.version = 11 : i64} {
  func.func @_focal_hm_kernel(%arg0: i32, %arg1: memref<8x512xf32, #tpu.memory_space<vmem>>, %arg2: memref<8x512xf32, #tpu.memory_space<vmem>>, %arg3: memref<1x8x512xf32, #tpu.memory_space<vmem>>, %arg4: memref<1x8x512xf32, #tpu.memory_space<vmem>>, %arg5: memref<1x8x512xf32, #tpu.memory_space<vmem>>) attributes {dimension_semantics = [#tpu.dimension_semantics<parallel>], iteration_bounds = array<i64: 1>, scalar_prefetch = 0 : i64, scratch_operands = 0 : i64, tpu.core_type = #tpu.core_type<tc>, window_params = [{transform_indices = @transform_0, window_bounds = array<i64: 8, 512>}, {transform_indices = @transform_1, window_bounds = array<i64: 8, 512>}, {transform_indices = @transform_2, window_bounds = array<i64: 1, 8, 512>}, {transform_indices = @transform_3, window_bounds = array<i64: 1, 8, 512>}, {transform_indices = @transform_4, window_bounds = array<i64: 1, 8, 512>}]} {
    %c0 = arith.constant 0 : index
    %c0_0 = arith.constant 0 : index
    %0 = vector.load %arg1[%c0, %c0_0] : memref<8x512xf32, #tpu.memory_space<vmem>>, vector<8x512xf32>
    %c0_1 = arith.constant 0 : index
    %c0_2 = arith.constant 0 : index
    %1 = vector.load %arg2[%c0_1, %c0_2] : memref<8x512xf32, #tpu.memory_space<vmem>>, vector<8x512xf32>
    %2 = tpu.iota {dimensions = array<i32: 0>} : vector<8x512xi32>
    %3 = tpu.iota {dimensions = array<i32: 1>} : vector<8x512xi32>
    %c8_i32 = arith.constant 8 : i32
    %4 = arith.muli %arg0, %c8_i32 : i32
    %5 = vector.broadcast %4 : i32 to vector<8x512xi32>
    %6 = arith.addi %5, %2 : vector<8x512xi32>
    %c512_i32 = arith.constant 512 : i32
    %7 = vector.broadcast %c512_i32 : i32 to vector<8x512xi32>
    %8 = arith.muli %6, %7 : vector<8x512xi32>
    %9 = arith.addi %8, %3 : vector<8x512xi32>
    %c2048_i32 = arith.constant 2048 : i32
    %10 = vector.broadcast %c2048_i32 : i32 to vector<8x512xi32>
    %11 = arith.cmpi slt, %9, %10 : vector<8x512xi32>
    %cst = arith.constant 1.000000e+00 : f32
    %12 = vector.broadcast %cst : f32 to vector<8x512xf32>
    %13 = arith.cmpf oeq, %1, %12 : vector<8x512xf32>
    %14 = arith.andi %13, %11 : vector<8x512xi1>
    %cst_3 = arith.constant 1.000000e+00 : f32
    %cst_4 = arith.constant 0.000000e+00 : f32
    %15 = vector.broadcast %cst_3 : f32 to vector<8x512xf32>
    %16 = vector.broadcast %cst_4 : f32 to vector<8x512xf32>
    %17 = arith.select %14, %15, %16 : vector<8x512xi1>, vector<8x512xf32>
    %cst_5 = arith.constant 1.000000e+00 : f32
    %18 = vector.broadcast %cst_5 : f32 to vector<8x512xf32>
    %19 = arith.cmpf olt, %1, %18 : vector<8x512xf32>
    %20 = arith.andi %19, %11 : vector<8x512xi1>
    %cst_6 = arith.constant 1.000000e+00 : f32
    %cst_7 = arith.constant 0.000000e+00 : f32
    %21 = vector.broadcast %cst_6 : f32 to vector<8x512xf32>
    %22 = vector.broadcast %cst_7 : f32 to vector<8x512xf32>
    %23 = arith.select %20, %21, %22 : vector<8x512xi1>, vector<8x512xf32>
    %cst_8 = arith.constant 1.000000e+00 : f32
    %24 = vector.broadcast %cst_8 : f32 to vector<8x512xf32>
    %25 = arith.subf %24, %1 : vector<8x512xf32>
    %26 = arith.mulf %25, %25 : vector<8x512xf32>
    %27 = arith.mulf %26, %26 : vector<8x512xf32>
    %cst_9 = arith.constant 1.000000e+00 : f32
    %28 = vector.broadcast %cst_9 : f32 to vector<8x512xf32>
    %29 = arith.subf %28, %0 : vector<8x512xf32>
    %30 = math.log %0 : vector<8x512xf32>
    %31 = arith.mulf %29, %29 : vector<8x512xf32>
    %32 = arith.mulf %30, %31 : vector<8x512xf32>
    %33 = arith.mulf %32, %17 : vector<8x512xf32>
    %34 = math.log %29 : vector<8x512xf32>
    %35 = arith.mulf %0, %0 : vector<8x512xf32>
    %36 = arith.mulf %34, %35 : vector<8x512xf32>
    %37 = arith.mulf %36, %27 : vector<8x512xf32>
    %38 = arith.mulf %37, %23 : vector<8x512xf32>
    %39 = vector.shape_cast %33 : vector<8x512xf32> to vector<1x8x512xf32>
    %cst_10 = arith.constant dense<0.000000e+00> : vector<8x512xf32>
    %40 = vector.multi_reduction <add>, %39, %cst_10 [0] : vector<1x8x512xf32> to vector<8x512xf32>
    %41 = vector.shape_cast %40 : vector<8x512xf32> to vector<1x8x512xf32>
    %c0_11 = arith.constant 0 : index
    %c0_12 = arith.constant 0 : index
    %c0_13 = arith.constant 0 : index
    %42 = vector.load %arg3[%c0_11, %c0_12, %c0_13] : memref<1x8x512xf32, #tpu.memory_space<vmem>>, vector<1x8x512xf32>
    tpu.vector_store %arg3[%c0_11, %c0_12, %c0_13], %41 {strides = array<i32>} : memref<1x8x512xf32, #tpu.memory_space<vmem>>, vector<1x8x512xf32>,
    %43 = vector.shape_cast %38 : vector<8x512xf32> to vector<1x8x512xf32>
    %cst_14 = arith.constant dense<0.000000e+00> : vector<8x512xf32>
    %44 = vector.multi_reduction <add>, %43, %cst_14 [0] : vector<1x8x512xf32> to vector<8x512xf32>
    %45 = vector.shape_cast %44 : vector<8x512xf32> to vector<1x8x512xf32>
    %c0_15 = arith.constant 0 : index
    %c0_16 = arith.constant 0 : index
    %c0_17 = arith.constant 0 : index
    %46 = vector.load %arg4[%c0_15, %c0_16, %c0_17] : memref<1x8x512xf32, #tpu.memory_space<vmem>>, vector<1x8x512xf32>
    tpu.vector_store %arg4[%c0_15, %c0_16, %c0_17], %45 {strides = array<i32>} : memref<1x8x512xf32, #tpu.memory_space<vmem>>, vector<1x8x512xf32>,
    %47 = vector.shape_cast %17 : vector<8x512xf32> to vector<1x8x512xf32>
    %cst_18 = arith.constant dense<0.000000e+00> : vector<8x512xf32>
    %48 = vector.multi_reduction <add>, %47, %cst_18 [0] : vector<1x8x512xf32> to vector<8x512xf32>
    %49 = vector.shape_cast %48 : vector<8x512xf32> to vector<1x8x512xf32>
    %c0_19 = arith.constant 0 : index
    %c0_20 = arith.constant 0 : index
    %c0_21 = arith.constant 0 : index
    %50 = vector.load %arg5[%c0_19, %c0_20, %c0_21] : memref<1x8x512xf32, #tpu.memory_space<vmem>>, vector<1x8x512xf32>
    tpu.vector_store %arg5[%c0_19, %c0_20, %c0_21], %49 {strides = array<i32>} : memref<1x8x512xf32, #tpu.memory_space<vmem>>, vector<1x8x512xf32>,
    return
  }
  func.func @transform_0(%arg0: i32) -> (i32, i32) {
    %c0_i32 = arith.constant 0 : i32
    %c0_i32_0 = arith.constant 0 : i32
    return %arg0, %c0_i32 : i32, i32
  }
  func.func @transform_1(%arg0: i32) -> (i32, i32) {
    %c0_i32 = arith.constant 0 : i32
    %c0_i32_0 = arith.constant 0 : i32
    return %arg0, %c0_i32 : i32, i32
  }
  func.func @transform_2(%arg0: i32) -> (i32, i32, i32) {
    %c0_i32 = arith.constant 0 : i32
    %c0_i32_0 = arith.constant 0 : i32
    %c0_i32_1 = arith.constant 0 : i32
    return %arg0, %c0_i32, %c0_i32_0 : i32, i32, i32
  }
  func.func @transform_3(%arg0: i32) -> (i32, i32, i32) {
    %c0_i32 = arith.constant 0 : i32
    %c0_i32_0 = arith.constant 0 : i32
    %c0_i32_1 = arith.constant 0 : i32
    return %arg0, %c0_i32, %c0_i32_0 : i32, i32, i32
  }
  func.func @transform_4(%arg0: i32) -> (i32, i32, i32) {
    %c0_i32 = arith.constant 0 : i32
    %c0_i32_0 = arith.constant 0 : i32
    %c0_i32_1 = arith.constant 0 : i32
    return %arg0, %c0_i32, %c0_i32_0 : i32, i32, i32
  }
}

</mosaic_0001>

<llo_original>
// kernel: focal_loss_hm.1
$region0: #{focal_loss_hm.1}
  #allocation0 [shape = 'u32[]', space=smem, size = 0x4, offset = 0x4, fixed_abs, tag = 'smem constant byte address 0x4 - core index']
  #allocation1 [shape = 'u32[144,128]{1,0:T(1,128)}', space=vmem, size = 0x12000, scoped, tag = 'internal scratch']
  %s0 = inlined_call_operand.vmem [shape: f32[8,512], index: 0, kind: input, shape index: {}]
  %s1 = inlined_call_operand.vmem [shape: f32[8,512], index: 1, kind: input, shape index: {}]
  %s2 = inlined_call_operand.vmem [shape: f32[1,8,512], index: 2, kind: output, shape index: {0}]
  %s3 = inlined_call_operand.vmem [shape: f32[1,8,512], index: 3, kind: output, shape index: {1}]
  %s4 = inlined_call_operand.vmem [shape: f32[1,8,512], index: 4, kind: output, shape index: {2}]
  %5 = xla_tuple %s2, %s3, %s4
  %s6 = sld [smem:[#allocation0]]
  $region34: #{focal_loss_hm.1} parent=0
    _
  %s8 = ssub.s32 1, %s6
  %s9 = scalar_select 0, %s8, %s6
  // Predicated region
  $region2: #{focal_loss_hm.1} parent=0 // pred_check
    _
  $region3: #{focal_loss_hm.1} parent=0 // pred_check_branch
    %11 = sbr.rel (0) target = $region5
  $region4: #{focal_loss_hm.1} parent=0 // pred_region
    _
  $region5: #{focal_loss_hm.1} parent=0 // pred_fallthru
    _
  // Predicated region
  $region6: #{focal_loss_hm.1} parent=0 // pred_check
    _
  $region7: #{focal_loss_hm.1} parent=0 // pred_check_branch
    %13 = sbr.rel (0) target = $region9
  $region8: #{focal_loss_hm.1} parent=0 // pred_region
    _
  $region9: #{focal_loss_hm.1} parent=0 // pred_fallthru
    _
  %v14 = vld [vmem:[%s0] sm:$0xff]
  %v15 = vld [vmem:[%s0 + $0x8] sm:$0xff]
  %v16 = vld [vmem:[%s0 + $0x10] sm:$0xff]
  %v17 = vld [vmem:[%s0 + $0x18] sm:$0xff]
  %v18 = vld [vmem:[%s1] sm:$0xff]
  %v19 = vld [vmem:[%s1 + $0x8] sm:$0xff]
  %v20 = vld [vmem:[%s1 + $0x10] sm:$0xff]
  %v21 = vld [vmem:[%s1 + $0x18] sm:$0xff]
  %v22 = vlaneseq
  %v23 = vshrl.u32 %v22, 7
  %v24 = vlaneseq
  %v25 = vand.u32 %v24, 127
  %v26 = vadd.s32 %v25, 128
  %v27 = vadd.s32 %v25, 256
  %v28 = vadd.s32 %v25, 384
  %s29 = smul.u32 0, 8
  %v30 = vstv %s29
  %v31 = vadd.s32 %v30, %v23
  %v32 = vmul.u32 %v31, 512
  %v33 = vadd.s32 %v32, %v25
  %v34 = vadd.s32 %v32, %v26
  %v35 = vadd.s32 %v32, %v27
  %v36 = vadd.s32 %v32, %v28
  %vm37 = vcmp.lt.s32.totalorder %v33, 2048
  %vm38 = vcmp.lt.s32.totalorder %v34, 2048
  %vm39 = vcmp.lt.s32.totalorder %v35, 2048
  %vm40 = vcmp.lt.s32.totalorder %v36, 2048
  %vm41 = vcmp.eq.f32.partialorder %v18, 1.0
  %vm42 = vcmp.eq.f32.partialorder %v19, 1.0
  %vm43 = vcmp.eq.f32.partialorder %v20, 1.0
  %vm44 = vcmp.eq.f32.partialorder %v21, 1.0
  %vm45 = vmand %vm41, %vm37
  %vm46 = vmand %vm42, %vm38
  %vm47 = vmand %vm43, %vm39
  %vm48 = vmand %vm44, %vm40
  %v49 = vsel %vm45, 1.0, 0.0
  %v50 = vsel %vm46, 1.0, 0.0
  %v51 = vsel %vm47, 1.0, 0.0
  %v52 = vsel %vm48, 1.0, 0.0
  %vm53 = vcmp.lt.f32.partialorder %v18, 1.0
  %vm54 = vcmp.lt.f32.partialorder %v19, 1.0
  %vm55 = vcmp.lt.f32.partialorder %v20, 1.0
  %vm56 = vcmp.lt.f32.partialorder %v21, 1.0
  %vm57 = vmand %vm53, %vm37
  %vm58 = vmand %vm54, %vm38
  %vm59 = vmand %vm55, %vm39
  %vm60 = vmand %vm56, %vm40
  %v61 = vsel %vm57, 1.0, 0.0
  %v62 = vsel %vm58, 1.0, 0.0
  %v63 = vsel %vm59, 1.0, 0.0
  %v64 = vsel %vm60, 1.0, 0.0
  %v65 = vsub.f32 1.0, %v18
  %v66 = vsub.f32 1.0, %v19
  %v67 = vsub.f32 1.0, %v20
  %v68 = vsub.f32 1.0, %v21
  %v69 = vmul.f32 %v65, %v65
  %v70 = vmul.f32 %v66, %v66
  %v71 = vmul.f32 %v67, %v67
  %v72 = vmul.f32 %v68, %v68
  %v73 = vmul.f32 %v69, %v69
  %v74 = vmul.f32 %v70, %v70
  %v75 = vmul.f32 %v71, %v71
  %v76 = vmul.f32 %v72, %v72
  %v77 = vsub.f32 1.0, %v14
  %v78 = vsub.f32 1.0, %v15
  %v79 = vsub.f32 1.0, %v16
  %v80 = vsub.f32 1.0, %v17
  %v81 = vlog2.pop %v14
  %v82 = vmul.f32 %v81, 0.6931472
  %v83 = vlog2.pop %v15
  %v84 = vmul.f32 %v83, 0.6931472
  %v85 = vlog2.pop %v16
  %v86 = vmul.f32 %v85, 0.6931472
  %v87 = vlog2.pop %v17
  %v88 = vmul.f32 %v87, 0.6931472
  %v89 = vmul.f32 %v77, %v77
  %v90 = vmul.f32 %v78, %v78
  %v91 = vmul.f32 %v79, %v79
  %v92 = vmul.f32 %v80, %v80
  %v93 = vmul.f32 %v82, %v89
  %v94 = vmul.f32 %v84, %v90
  %v95 = vmul.f32 %v86, %v91
  %v96 = vmul.f32 %v88, %v92
  %v97 = vmul.f32 %v93, %v49
  %v98 = vmul.f32 %v94, %v50
  %v99 = vmul.f32 %v95, %v51
  %v100 = vmul.f32 %v96, %v52
  %v101 = vlog2.pop %v77
  %v102 = vmul.f32 %v101, 0.6931472
  %v103 = vlog2.pop %v78
  %v104 = vmul.f32 %v103, 0.6931472
  %v105 = vlog2.pop %v79
  %v106 = vmul.f32 %v105, 0.6931472
  %v107 = vlog2.pop %v80
  %v108 = vmul.f32 %v107, 0.6931472
  %v109 = vmul.f32 %v14, %v14
  %v110 = vmul.f32 %v15, %v15
  %v111 = vmul.f32 %v16, %v16
  %v112 = vmul.f32 %v17, %v17
  %v113 = vmul.f32 %v102, %v109
  %v114 = vmul.f32 %v104, %v110
  %v115 = vmul.f32 %v106, %v111
  %v116 = vmul.f32 %v108, %v112
  %v117 = vmul.f32 %v113, %v73
  %v118 = vmul.f32 %v114, %v74
  %v119 = vmul.f32 %v115, %v75
  %v120 = vmul.f32 %v116, %v76
  %v121 = vmul.f32 %v117, %v61
  %v122 = vmul.f32 %v118, %v62
  %v123 = vmul.f32 %v119, %v63
  %v124 = vmul.f32 %v120, %v64
  %v125 = vadd.f32 %v97, 0.0
  %v126 = vadd.f32 %v98, 0.0
  %v127 = vadd.f32 %v99, 0.0
  %v128 = vadd.f32 %v100, 0.0
  %129 = vst [vmem:[%s2] sm:$0xff] %v125
  %130 = vst [vmem:[%s2 + $0x8] sm:$0xff] %v126
  %131 = vst [vmem:[%s2 + $0x10] sm:$0xff] %v127
  %132 = vst [vmem:[%s2 + $0x18] sm:$0xff] %v128
  %v133 = vadd.f32 %v121, 0.0
  %v134 = vadd.f32 %v122, 0.0
  %v135 = vadd.f32 %v123, 0.0
  %v136 = vadd.f32 %v124, 0.0
  %137 = vst [vmem:[%s3] sm:$0xff] %v133
  %138 = vst [vmem:[%s3 + $0x8] sm:$0xff] %v134
  %139 = vst [vmem:[%s3 + $0x10] sm:$0xff] %v135
  %140 = vst [vmem:[%s3 + $0x18] sm:$0xff] %v136
  %v141 = vadd.f32 %v49, 0.0
  %v142 = vadd.f32 %v50, 0.0
  %v143 = vadd.f32 %v51, 0.0
  %v144 = vadd.f32 %v52, 0.0
  %145 = vst [vmem:[%s4] sm:$0xff] %v141
  %146 = vst [vmem:[%s4 + $0x8] sm:$0xff] %v142
  %147 = vst [vmem:[%s4 + $0x10] sm:$0xff] %v143
  %148 = vst [vmem:[%s4 + $0x18] sm:$0xff] %v144
  // Predicated region
  $region10: #{focal_loss_hm.1} parent=0 // pred_check
    _
  $region11: #{focal_loss_hm.1} parent=0 // pred_check_branch
    %150 = sbr.rel (0) target = $region13
  $region12: #{focal_loss_hm.1} parent=0 // pred_region
    _
  $region13: #{focal_loss_hm.1} parent=0 // pred_fallthru
    _
  // Predicated region
  $region14: #{focal_loss_hm.1} parent=0 // pred_check
    _
  $region15: #{focal_loss_hm.1} parent=0 // pred_check_branch
    %152 = sbr.rel (0) target = $region17
  $region16: #{focal_loss_hm.1} parent=0 // pred_region
    _
  $region17: #{focal_loss_hm.1} parent=0 // pred_fallthru
    _
  // Predicated region
  $region18: #{focal_loss_hm.1} parent=0 // pred_check
    _
  $region19: #{focal_loss_hm.1} parent=0 // pred_check_branch
    %154 = sbr.rel (0) target = $region21
  $region20: #{focal_loss_hm.1} parent=0 // pred_region
    _
  $region21: #{focal_loss_hm.1} parent=0 // pred_fallthru
    _
  // Predicated region
  $region22: #{focal_loss_hm.1} parent=0 // pred_check
    _
  $region23: #{focal_loss_hm.1} parent=0 // pred_check_branch
    %156 = sbr.rel (0) target = $region25
  $region24: #{focal_loss_hm.1} parent=0 // pred_region
    _
  $region25: #{focal_loss_hm.1} parent=0 // pred_fallthru
    _
  // Predicated region
  $region26: #{focal_loss_hm.1} parent=0 // pred_check
    _
  $region27: #{focal_loss_hm.1} parent=0 // pred_check_branch
    %158 = sbr.rel (0) target = $region29
  $region28: #{focal_loss_hm.1} parent=0 // pred_region
    _
  $region29: #{focal_loss_hm.1} parent=0 // pred_fallthru
    _
  // Predicated region
  $region30: #{focal_loss_hm.1} parent=0 // pred_check
    _
  $region31: #{focal_loss_hm.1} parent=0 // pred_check_branch
    %160 = sbr.rel (0) target = $region33
  $region32: #{focal_loss_hm.1} parent=0 // pred_region
    _
  $region33: #{focal_loss_hm.1} parent=0 // pred_fallthru
    _

</llo_original>
